<compile_context>
chip_gen: v6e
topology: v6e:2x2x1
jax: 0.10.0
libtpu: 0.0.40
codegen_flags: <defaults>
</compile_context>

<pallas_src>
import functools

import jax
import jax.numpy as jnp
from jax.experimental import pallas as pl
from jax.experimental.pallas import tpu as pltpu


def _round_up(v, m):
    return ((v + m - 1) // m) * m


def _cdiv(a, b):
    return -(-a // b)


# --------------------------------- kernel -----------------------------------------
def _single_kernel(x_ref, w_dim_ref, b_dim_ref, w_stg_ref, b_stg_ref, w_rec_ref,
                   rec_ref, ts_ref):
    x = x_ref[...]  # (TM, n_hidden) float32

    # dim_reduction: Linear(n_hidden -> t_pad). Padded topic lanes carry a -1e30 bias.
    logits = (jnp.dot(x, w_dim_ref[...], preferred_element_type=jnp.float32)
              + b_dim_ref[...])

    # spv_stage_label on the pre-softmax logits. W_stg is stored as (t_pad, t_pad) with the
    # real (T, S) block placed at column offset T and zero rows for padded logit lanes, so
    # `stage` already sits in lanes [T, T+S) of the packed output and is exact.
    stage = (jnp.dot(logits, w_stg_ref[...], preferred_element_type=jnp.float32)
             + b_stg_ref[...])

    # Softmax over the topic axis; padded lanes -> exp(-1e30 - m) == 0 exactly.
    m = jnp.max(logits, axis=1, keepdims=True)
    e = jnp.exp(logits - m)
    td = e / jnp.sum(e, axis=1, keepdims=True)          # exact divide (denom >= 1)

    # reconstruction: Linear(t_pad -> h_pad, no bias); padded td lanes are exactly 0.
    rec = jnp.dot(td, w_rec_ref[...], preferred_element_type=jnp.float32)

    rec_ref[...] = rec.astype(rec_ref.dtype)
    # Dense pack: lanes [0,T) hold topic_dist (stage is 0 there), lanes [T,T+S) hold
    # stage_vec (topic_dist is 0 there), remaining lanes are 0. Single lane-dense store.
    ts_ref[...] = (td + stage).astype(ts_ref.dtype)


# ------------------------------ one-time weight prep --------------------------------
def prepare_params(params):
    """Pad / place the weights once, outside the forward path."""
    w_dim, b_dim = params["w_dim"], params["b_dim"]      # (H, T), (1, T)
    w_stg, b_stg = params["w_stg"], params["b_stg"]      # (T, S), (1, S)
    w_rec = params["w_rec"]                              # (T, H)
    n_hidden, n_topics = w_dim.shape
    n_stage = w_stg.shape[1]

    # Topic lanes also host the packed stage lanes.
    t_pad = _round_up(n_topics + n_stage, 128)
    h_pad = _round_up(n_hidden, 128)

    w_dim_p = jnp.pad(w_dim, ((0, 0), (0, t_pad - n_topics))).astype(jnp.float32)
    # -1e30 bias on padded topic lanes -> softmax prob exactly 0 there.
    b_dim_p = jnp.pad(b_dim, ((0, 0), (0, t_pad - n_topics)),
                      constant_values=-1e30).astype(jnp.float32)
    w_stg_p = jnp.zeros((t_pad, t_pad), jnp.float32)
    w_stg_p = w_stg_p.at[:n_topics, n_topics:n_topics + n_stage].set(w_stg)
    b_stg_p = jnp.zeros((1, t_pad), jnp.float32)
    b_stg_p = b_stg_p.at[:, n_topics:n_topics + n_stage].set(b_stg)
    w_rec_p = jnp.pad(w_rec, ((0, t_pad - n_topics),
                              (0, h_pad - n_hidden))).astype(jnp.float32)

    prep = {"w_dim": w_dim_p, "b_dim": b_dim_p, "w_stg": w_stg_p,
            "b_stg": b_stg_p, "w_rec": w_rec_p}
    dims = (int(n_hidden), int(n_topics), int(n_stage), int(t_pad), int(h_pad))
    return prep, dims


def _device_budget():
    """(max batch tile, scoped VMEM limit) per TPU generation."""
    try:
        kind = jax.devices()[0].device_kind.lower()
    except Exception:  # pragma: no cover
        kind = ""
    if ("v5" in kind) or ("v6" in kind):
        # 128 MiB VMEM parts: large scoped limit + big batch tiles.
        return 1024, 96 * 1024 * 1024
    # v7x has only 64 MiB per TensorCore; also the safe choice for unknown backends.
    return 512, 52 * 1024 * 1024


# ----------------------------------- forward ----------------------------------------
@functools.partial(jax.jit, static_argnames=("dims", "tm"))
def single_forward(x, neg_x, prep, dims, *, tm=None):
    """Single-layer baseline forward. x, neg_x: [batch, n_hidden] float32."""
    n_hidden, n_topics, n_stage, t_pad, h_pad = dims
    batch = x.shape[0]

    tm_cap, vmem_budget = _device_budget()
    if tm is not None:
        tm_cap = int(tm)

    # Resident weight footprint; single-buffer the constant weights once the second
    # copy would meaningfully eat VMEM (tiny weights: default double-buffering is fine).
    weight_elems = (n_hidden * t_pad + t_pad + t_pad * t_pad + t_pad + t_pad * h_pad)
    single_buffer_weights = 4 * weight_elems > (2 << 20)
    weight_buf = 1 if single_buffer_weights else 2

    # Fit the batch tile into the VMEM budget: x tile + 2 output tiles, double-buffered.
    per_row_bytes = 2 * 4 * (n_hidden + h_pad + t_pad)
    avail = vmem_budget - weight_buf * 4 * weight_elems - (2 << 20)
    tm_fit = max(8, (max(avail, 0) // per_row_bytes) // 8 * 8)
    tm_cap = max(8, min(tm_cap, tm_fit))

    # Batch tiling: minimise dead padded rows (last tile is not almost-empty) and keep
    # >= 2 tiles when batch allows so v7x's second TensorCore gets work on the parallel axis.
    num_tiles = _cdiv(batch, tm_cap)
    if batch >= 16:
        num_tiles = max(num_tiles, 2)
    tm_eff = max(8, _round_up(_cdiv(batch, num_tiles), 8))
    batch_p = num_tiles * tm_eff
    x_p = jnp.pad(x.astype(jnp.float32), ((0, batch_p - batch), (0, 0)))

    row_spec = lambda cols: pl.BlockSpec((tm_eff, cols), lambda i: (i, 0))
    if single_buffer_weights:
        resident = lambda shape: pl.BlockSpec(shape, lambda i: (0, 0),
                                              pipeline_mode=pl.Buffered(1))
    else:
        resident = lambda shape: pl.BlockSpec(shape, lambda i: (0, 0))

    cost = pl.CostEstimate(
        flops=int(2 * batch_p * (n_hidden * t_pad + t_pad * t_pad + t_pad * h_pad)),
        transcendentals=int(batch_p * t_pad),
        bytes_accessed=int(4 * (batch_p * (n_hidden + h_pad + t_pad) + weight_elems)),
    )

    rec_p, ts_p = pl.pallas_call(
        _single_kernel,
        out_shape=(
            jax.ShapeDtypeStruct((batch_p, h_pad), jnp.float32),  # reconstructed_vec
            jax.ShapeDtypeStruct((batch_p, t_pad), jnp.float32),  # packed [topic_dist|stage]
        ),
        grid_spec=pltpu.PrefetchScalarGridSpec(
            num_scalar_prefetch=0,
            grid=(num_tiles,),
            in_specs=[
                row_spec(n_hidden),                 # x tile (streamed over batch)
                resident((n_hidden, t_pad)),        # W_dim (padded)
                resident((1, t_pad)),               # b_dim (padded, -1e30 tail)
                resident((t_pad, t_pad)),           # W_stg placed at column offset n_topics
                resident((1, t_pad)),               # b_stg placed at column offset n_topics
                resident((t_pad, h_pad)),           # W_rec (padded)
            ],
            out_specs=(row_spec(h_pad), row_spec(t_pad)),
        ),
        compiler_params=pltpu.CompilerParams(
            dimension_semantics=("parallel",),
            vmem_limit_bytes=int(vmem_budget),
        ),
        cost_estimate=cost,
    )(x_p, prep["w_dim"], prep["b_dim"], prep["w_stg"], prep["b_stg"], prep["w_rec"])

    rec = rec_p[:batch, :n_hidden]
    td = ts_p[:batch, :n_topics]
    stage = ts_p[:batch, n_topics:n_topics + n_stage]

    # TODO(synk): `graph_vec` is undefined (NameError) in the original forward; pass x through.
    graph_vec = x
    neg_graph_vec = neg_x  # pure passthrough in the original forward
    return rec, graph_vec, neg_graph_vec, td, stage


# -------------------------------- params / reference --------------------------------
def init_params(key, n_hidden, n_topics, n_stage=6):
    """Deterministic synthetic parameters. Weights stored as [in, out] (PyTorch W.T)."""
    k1, k2, k3, k4, k5 = jax.random.split(key, 5)
    scale = 0.1
    return {
        "w_dim": scale * jax.random.normal(k1, (n_hidden, n_topics), jnp.float32),
        "b_dim": scale * jax.random.normal(k2, (1, n_topics), jnp.float32),
        "w_stg": scale * jax.random.normal(k3, (n_topics, n_stage), jnp.float32),
        "b_stg": scale * jax.random.normal(k4, (1, n_stage), jnp.float32),
        "w_rec": scale * jax.random.normal(k5, (n_topics, n_hidden), jnp.float32),
    }


def _reference(x, neg_x, p):
    hi = jax.lax.Precision.HIGHEST
    logits = jnp.dot(x, p["w_dim"], precision=hi) + p["b_dim"]
    stage = jnp.dot(logits, p["w_stg"], precision=hi) + p["b_stg"]
    td = jax.nn.softmax(logits, axis=1)
    rec = jnp.dot(td, p["w_rec"], precision=hi)
    return rec, x, neg_x, td, stage


def _check_case(key, batch, n_hidden, n_topics):
    kx, kn, kp = jax.random.split(key, 3)
    x = jax.random.normal(kx, (batch, n_hidden), jnp.float32)
    neg_x = jax.random.normal(kn, (batch, n_hidden), jnp.float32)
    params = init_params(kp, n_hidden, n_topics)
    prep, dims = prepare_params(params)

    outs = single_forward(x, neg_x, prep, dims)
    outs = jax.block_until_ready(outs)

    refs = _reference(x, neg_x, params)
    for o, r in zip(outs, refs):
        assert o.shape == r.shape and o.dtype == r.dtype
        assert float(jnp.max(jnp.abs(o - r))) < 1e-4, "mismatch vs pure-JAX reference"


if __name__ == "__main__":
    key = jax.random.PRNGKey(0)
    k1, k2 = jax.random.split(key)
    # Small canonical shape (single tile).
    _check_case(k1, batch=8, n_hidden=32, n_topics=5)
    # Multi-tile path (grid >= 2, batch padding logic).
    _check_case(k2, batch=40, n_hidden=64, n_topics=7)
    print("KERNEL_OK")
</pallas_src>

<mosaic_0001>
module attributes {stable_mosaic.version = 11 : i64} {
  func.func @_single_kernel(%arg0: i32, %arg1: memref<8x32xf32, #tpu.memory_space<vmem>>, %arg2: memref<32x128xf32, #tpu.memory_space<vmem>>, %arg3: memref<1x128xf32, #tpu.memory_space<vmem>>, %arg4: memref<128x128xf32, #tpu.memory_space<vmem>>, %arg5: memref<1x128xf32, #tpu.memory_space<vmem>>, %arg6: memref<128x128xf32, #tpu.memory_space<vmem>>, %arg7: memref<8x128xf32, #tpu.memory_space<vmem>>, %arg8: memref<8x128xf32, #tpu.memory_space<vmem>>) attributes {dimension_semantics = [#tpu.dimension_semantics<parallel>], iteration_bounds = array<i64: 1>, scalar_prefetch = 0 : i64, scratch_operands = 0 : i64, tpu.core_type = #tpu.core_type<tc>, window_params = [{transform_indices = @transform_0, window_bounds = array<i64: 8, 32>}, {pipeline_mode = #tpu.pipeline_mode<synchronous>, transform_indices = @transform_1, window_bounds = array<i64: 32, 128>}, {pipeline_mode = #tpu.pipeline_mode<synchronous>, transform_indices = @transform_2, window_bounds = array<i64: 1, 128>}, {pipeline_mode = #tpu.pipeline_mode<synchronous>, transform_indices = @transform_3, window_bounds = array<i64: 128, 128>}, {pipeline_mode = #tpu.pipeline_mode<synchronous>, transform_indices = @transform_4, window_bounds = array<i64: 1, 128>}, {pipeline_mode = #tpu.pipeline_mode<synchronous>, transform_indices = @transform_5, window_bounds = array<i64: 128, 128>}, {transform_indices = @transform_6, window_bounds = array<i64: 8, 128>}, {transform_indices = @transform_7, window_bounds = array<i64: 8, 128>}]} {
    %c0 = arith.constant 0 : index
    %c0_0 = arith.constant 0 : index
    %0 = vector.load %arg1[%c0, %c0_0] : memref<8x32xf32, #tpu.memory_space<vmem>>, vector<8x32xf32>
    %c0_1 = arith.constant 0 : index
    %c0_2 = arith.constant 0 : index
    %1 = vector.load %arg2[%c0_1, %c0_2] : memref<32x128xf32, #tpu.memory_space<vmem>>, vector<32x128xf32>
    %cst = arith.constant dense<0.000000e+00> : vector<8x128xf32>
    %2 = tpu.matmul %0, %1, %cst {dimension_numbers = #tpu.dot_dimension_numbers<[1], [0], [0], [1], [0, 0, 1, 1], [], []>} : vector<8x32xf32>, vector<32x128xf32>, vector<8x128xf32> -> vector<8x128xf32>
    %c0_3 = arith.constant 0 : index
    %c0_4 = arith.constant 0 : index
    %3 = vector.load %arg3[%c0_3, %c0_4] : memref<1x128xf32, #tpu.memory_space<vmem>>, vector<1x128xf32>
    %4 = vector.broadcast %3 : vector<1x128xf32> to vector<8x128xf32>
    %5 = arith.addf %2, %4 : vector<8x128xf32>
    %c0_5 = arith.constant 0 : index
    %c0_6 = arith.constant 0 : index
    %6 = vector.load %arg4[%c0_5, %c0_6] : memref<128x128xf32, #tpu.memory_space<vmem>>, vector<128x128xf32>
    %cst_7 = arith.constant dense<0.000000e+00> : vector<8x128xf32>
    %7 = tpu.matmul %5, %6, %cst_7 {dimension_numbers = #tpu.dot_dimension_numbers<[1], [0], [0], [1], [0, 0, 1, 1], [], []>} : vector<8x128xf32>, vector<128x128xf32>, vector<8x128xf32> -> vector<8x128xf32>
    %c0_8 = arith.constant 0 : index
    %c0_9 = arith.constant 0 : index
    %8 = vector.load %arg5[%c0_8, %c0_9] : memref<1x128xf32, #tpu.memory_space<vmem>>, vector<1x128xf32>
    %9 = vector.broadcast %8 : vector<1x128xf32> to vector<8x128xf32>
    %10 = arith.addf %7, %9 : vector<8x128xf32>
    %cst_10 = arith.constant dense<0xFF800000> : vector<8xf32>
    %11 = vector.multi_reduction <maximumf>, %5, %cst_10 [1] : vector<8x128xf32> to vector<8xf32>
    %12 = vector.shape_cast %11 : vector<8xf32> to vector<8x1xf32>
    %13 = vector.broadcast %12 : vector<8x1xf32> to vector<8x128xf32>
    %14 = arith.subf %5, %13 : vector<8x128xf32>
    %15 = math.exp %14 : vector<8x128xf32>
    %cst_11 = arith.constant dense<0.000000e+00> : vector<8xf32>
    %16 = vector.multi_reduction <add>, %15, %cst_11 [1] : vector<8x128xf32> to vector<8xf32>
    %17 = vector.shape_cast %16 : vector<8xf32> to vector<8x1xf32>
    %18 = vector.broadcast %17 : vector<8x1xf32> to vector<8x128xf32>
    %19 = arith.divf %15, %18 : vector<8x128xf32>
    %c0_12 = arith.constant 0 : index
    %c0_13 = arith.constant 0 : index
    %20 = vector.load %arg6[%c0_12, %c0_13] : memref<128x128xf32, #tpu.memory_space<vmem>>, vector<128x128xf32>
    %cst_14 = arith.constant dense<0.000000e+00> : vector<8x128xf32>
    %21 = tpu.matmul %19, %20, %cst_14 {dimension_numbers = #tpu.dot_dimension_numbers<[1], [0], [0], [1], [0, 0, 1, 1], [], []>} : vector<8x128xf32>, vector<128x128xf32>, vector<8x128xf32> -> vector<8x128xf32>
    %c0_15 = arith.constant 0 : index
    %c0_16 = arith.constant 0 : index
    %22 = vector.load %arg7[%c0_15, %c0_16] : memref<8x128xf32, #tpu.memory_space<vmem>>, vector<8x128xf32>
    tpu.vector_store %arg7[%c0_15, %c0_16], %21 {strides = array<i32>} : memref<8x128xf32, #tpu.memory_space<vmem>>, vector<8x128xf32>,
    %23 = arith.addf %19, %10 : vector<8x128xf32>
    %c0_17 = arith.constant 0 : index
    %c0_18 = arith.constant 0 : index
    %24 = vector.load %arg8[%c0_17, %c0_18] : memref<8x128xf32, #tpu.memory_space<vmem>>, vector<8x128xf32>
    tpu.vector_store %arg8[%c0_17, %c0_18], %23 {strides = array<i32>} : memref<8x128xf32, #tpu.memory_space<vmem>>, vector<8x128xf32>,
    return
  }
  func.func @transform_0(%arg0: i32) -> (i32, i32) {
    %c0_i32 = arith.constant 0 : i32
    %c0_i32_0 = arith.constant 0 : i32
    return %arg0, %c0_i32 : i32, i32
  }
  func.func @transform_1(%arg0: i32) -> (i32, i32) {
    %c0_i32 = arith.constant 0 : i32
    %c0_i32_0 = arith.constant 0 : i32
    %c0_i32_1 = arith.constant 0 : i32
    return %c0_i32, %c0_i32_0 : i32, i32
  }
  func.func @transform_2(%arg0: i32) -> (i32, i32) {
    %c0_i32 = arith.constant 0 : i32
    %c0_i32_0 = arith.constant 0 : i32
    %c0_i32_1 = arith.constant 0 : i32
    return %c0_i32, %c0_i32_0 : i32, i32
  }
  func.func @transform_3(%arg0: i32) -> (i32, i32) {
    %c0_i32 = arith.constant 0 : i32
    %c0_i32_0 = arith.constant 0 : i32
    %c0_i32_1 = arith.constant 0 : i32
    return %c0_i32, %c0_i32_0 : i32, i32
  }
  func.func @transform_4(%arg0: i32) -> (i32, i32) {
    %c0_i32 = arith.constant 0 : i32
    %c0_i32_0 = arith.constant 0 : i32
    %c0_i32_1 = arith.constant 0 : i32
    return %c0_i32, %c0_i32_0 : i32, i32
  }
  func.func @transform_5(%arg0: i32) -> (i32, i32) {
    %c0_i32 = arith.constant 0 : i32
    %c0_i32_0 = arith.constant 0 : i32
    %c0_i32_1 = arith.constant 0 : i32
    return %c0_i32, %c0_i32_0 : i32, i32
  }
  func.func @transform_6(%arg0: i32) -> (i32, i32) {
    %c0_i32 = arith.constant 0 : i32
    %c0_i32_0 = arith.constant 0 : i32
    return %arg0, %c0_i32 : i32, i32
  }
  func.func @transform_7(%arg0: i32) -> (i32, i32) {
    %c0_i32 = arith.constant 0 : i32
    %c0_i32_0 = arith.constant 0 : i32
    return %arg0, %c0_i32 : i32, i32
  }
}

</mosaic_0001>

<llo_original>
// kernel: single_forward.1
$region0: #{single_forward.1}
  #allocation0 [shape = 'u32[]', space=smem, size = 0x4, offset = 0x4, fixed_abs, tag = 'smem constant byte address 0x4 - core index']
  #allocation1 [shape = 'u32[144,128]{1,0:T(1,128)}', space=vmem, size = 0x12000, scoped, tag = 'internal scratch']
  %s0 = inlined_call_operand.vmem [shape: f32[8,32], index: 0, kind: input, shape index: {}]
  %s1 = inlined_call_operand.hbm [shape: f32[32,128], index: 1, kind: input, shape index: {}]
  %s2 = inlined_call_operand.vmem [shape: f32[1,128], index: 2, kind: input, shape index: {}]
  %s3 = inlined_call_operand.hbm [shape: f32[128,128], index: 3, kind: input, shape index: {}]
  %s4 = inlined_call_operand.vmem [shape: f32[1,128], index: 4, kind: input, shape index: {}]
  %s5 = inlined_call_operand.hbm [shape: f32[128,128], index: 5, kind: input, shape index: {}]
  %s6 = inlined_call_operand.hbm [shape: f32[8,128], index: 6, kind: output, shape index: {0}]
  %s7 = inlined_call_operand.vmem [shape: f32[8,128], index: 7, kind: output, shape index: {1}]
  %8 = xla_tuple %s6, %s7
  %s9 = sld [smem:[#allocation0]]
  $region54: #{single_forward.1} parent=0
    _
  %s11 = ssub.s32 1, %s9
  %s12 = scalar_select 0, %s11, %s9
  $region1: #{single_forward.1} parent=0
    #allocation2 [shape = 'u8[16384]{0}', space=vmem, size = 0x4000, scoped, tag = 'input window, operand 1, single buffered']
    #allocation3 [shape = 's32[1]{0}', space=sflag, size = 0x4, scoped, tag = 'scoped memory for single_forward.1']
    #allocation4 [shape = 's32[1]{0}', space=sflag, size = 0x4, scoped, tag = 'scoped memory for single_forward.1']
    #allocation5 [shape = 'u8[65536]{0}', space=vmem, size = 0x10000, scoped, tag = 'input window, operand 3, single buffered']
    #allocation6 [shape = 's32[1]{0}', space=sflag, size = 0x4, scoped, tag = 'scoped memory for single_forward.1']
    #allocation7 [shape = 'u8[65536]{0}', space=vmem, size = 0x10000, scoped, tag = 'input window, operand 5, single buffered']
    #allocation8 [shape = 'u8[4096]{0}', space=vmem, size = 0x1000, scoped, tag = 'output window, operand 0, single buffered']
    %13 = vsyncpa [#allocation3], 0
    %14 = vsyncpa [#allocation6], 0
    %15 = vsyncpa [#allocation4], 0
    // Predicated region
    $region2: #{single_forward.1} parent=1 // pred_check
      _
    $region3: #{single_forward.1} parent=1 // pred_check_branch
      %17 = sbr.rel (0) target = $region5
    $region4: #{single_forward.1} parent=1 // pred_region
      _
    $region5: #{single_forward.1} parent=1 // pred_fallthru
      _
    // Predicated region
    $region6: #{single_forward.1} parent=1 // pred_check
      _
    $region7: #{single_forward.1} parent=1 // pred_check_branch
      %19 = sbr.rel (0) target = $region9
    $region8: #{single_forward.1} parent=1 // pred_region
      %s21 = ssub.s32 512, 512
      %22 = vsyncadd [#allocation3], %s21
      %s23 = sshll.u32 [#allocation2], 4
      %s24 = int_to_ptr.vmem [resolvable:$true] %s23
      %29 = dma.hbm_to_vmem [thread:$0]  %s1, 512, %s24, [#allocation3], 128, 128, 8
    $region9: #{single_forward.1} parent=1 // pred_fallthru
      _
    // Predicated region
    $region10: #{single_forward.1} parent=1 // pred_check
      _
    $region11: #{single_forward.1} parent=1 // pred_check_branch
      %31 = sbr.rel (0) target = $region13
    $region12: #{single_forward.1} parent=1 // pred_region
      _
    $region13: #{single_forward.1} parent=1 // pred_fallthru
      _
    // Predicated region
    $region14: #{single_forward.1} parent=1 // pred_check
      _
    $region15: #{single_forward.1} parent=1 // pred_check_branch
      %33 = sbr.rel (0) target = $region17
    $region16: #{single_forward.1} parent=1 // pred_region
      %s35 = ssub.s32 2048, 2048
      %36 = vsyncadd [#allocation6], %s35
      %s37 = sshll.u32 [#allocation5], 4
      %s38 = int_to_ptr.vmem [resolvable:$true] %s37
      %43 = dma.hbm_to_vmem [thread:$0]  %s3, 2048, %s38, [#allocation6], 128, 128, 8
    $region17: #{single_forward.1} parent=1 // pred_fallthru
      _
    // Predicated region
    $region18: #{single_forward.1} parent=1 // pred_check
      _
    $region19: #{single_forward.1} parent=1 // pred_check_branch
      %45 = sbr.rel (0) target = $region21
    $region20: #{single_forward.1} parent=1 // pred_region
      _
    $region21: #{single_forward.1} parent=1 // pred_fallthru
      _
    // Predicated region
    $region22: #{single_forward.1} parent=1 // pred_check
      _
    $region23: #{single_forward.1} parent=1 // pred_check_branch
      %47 = sbr.rel (0) target = $region25
    $region24: #{single_forward.1} parent=1 // pred_region
      %s49 = ssub.s32 2048, 2048
      %50 = vsyncadd [#allocation6], %s49
      %s51 = sshll.u32 [#allocation7], 4
      %s52 = int_to_ptr.vmem [resolvable:$true] %s51
      %57 = dma.hbm_to_vmem [thread:$0]  %s5, 2048, %s52, [#allocation6], 128, 128, 8
    $region25: #{single_forward.1} parent=1 // pred_fallthru
      _
    // Predicated region
    $region26: #{single_forward.1} parent=1 // pred_check
      _
    $region27: #{single_forward.1} parent=1 // pred_check_branch
      %59 = sbr.rel (0) target = $region29
    $region28: #{single_forward.1} parent=1 // pred_region
      %60 = dma.done [#allocation3], 512
    $region29: #{single_forward.1} parent=1 // pred_fallthru
      _
    // Predicated region
    $region30: #{single_forward.1} parent=1 // pred_check
      _
    $region31: #{single_forward.1} parent=1 // pred_check_branch
      %62 = sbr.rel (0) target = $region33
    $region32: #{single_forward.1} parent=1 // pred_region
      %63 = dma.done [#allocation6], 2048
    $region33: #{single_forward.1} parent=1 // pred_fallthru
      _
    // Predicated region
    $region34: #{single_forward.1} parent=1 // pred_check
      _
    $region35: #{single_forward.1} parent=1 // pred_check_branch
      %65 = sbr.rel (0) target = $region37
    $region36: #{single_forward.1} parent=1 // pred_region
      %66 = dma.done [#allocation6], 2048
    $region37: #{single_forward.1} parent=1 // pred_fallthru
      _
    %v67 = vld [vmem:[%s0] sm:$0xff]
    %v68 = vld [vmem:[#allocation2] sm:$0xff]
    %v69 = vld [vmem:[#allocation2 + $0x8] sm:$0xff]
    %v70 = vld [vmem:[#allocation2 + $0x10] sm:$0xff]
    %v71 = vld [vmem:[#allocation2 + $0x18] sm:$0xff]
    %v72 = vld [vmem:[%s2] sm:$0x1]
    %v74 = vlaneseq
    %v75 = vshrl.u32 %v74, 7
    %v76 = vsub.s32 0, %v75
    %v77 = vrot.slane %v72, %v76
    %vm79 = vcmask 261120
    %v81 = vsel %vm79, %v67, 0
    %83 = vmatprep.subr.mxu0 0.0
    %84 = vmatpush1.msra.mxu0 0.0
    %85 = vmatprep.subr.mxu0 0.0
    %86 = vmatpush1.msra.mxu0 0.0
    %87 = vmatprep.subr.mxu0 0.0
    %88 = vmatpush1.msra.mxu0 0.0
    %89 = vmatprep.subr.mxu0 0.0
    %90 = vmatpush1.msra.mxu0 0.0
    %91 = vmatprep.subr.mxu0 0.0
    %92 = vmatpush1.msra.mxu0 0.0
    %93 = vmatprep.subr.mxu0 0.0
    %94 = vmatpush1.msra.mxu0 0.0
    %95 = vmatprep.subr.mxu0 0.0
    %96 = vmatpush1.msra.mxu0 0.0
    %97 = vmatprep.subr.mxu0 0.0
    %98 = vmatpush1.msra.mxu0 0.0
    %99 = vmatprep.subr.mxu0 0.0
    %100 = vmatpush1.msra.mxu0 0.0
    %101 = vmatprep.subr.mxu0 0.0
    %102 = vmatpush1.msra.mxu0 0.0
    %103 = vmatprep.subr.mxu0 0.0
    %104 = vmatpush1.msra.mxu0 0.0
    %105 = vmatprep.subr.mxu0 0.0
    %106 = vmatpush1.msra.mxu0 0.0
    %107 = vmatprep.subr.mxu0 0.0
    %108 = vmatpush1.msra.mxu0 %v71
    %109 = vmatprep.subr.mxu0 0.0
    %110 = vmatpush1.msra.mxu0 %v70
    %111 = vmatprep.subr.mxu0 0.0
    %112 = vmatpush1.msra.mxu0 %v69
    %113 = vmatprep.subr.mxu0 0.0
    %114 = vmatpush1.msra.mxu0 %v68
    %115 = vmatprep.subr.mxu0 0.0
    %116 = vmatpush2.msra.mxu0 0.0
    %117 = vmatprep.subr.mxu0 0.0
    %118 = vmatpush2.msra.mxu0 0.0
    %119 = vmatprep.subr.mxu0 0.0
    %120 = vmatpush2.msra.mxu0 0.0
    %121 = vmatprep.subr.mxu0 0.0
    %122 = vmatpush2.msra.mxu0 0.0
    %123 = vmatprep.subr.mxu0 0.0
    %124 = vmatpush2.msra.mxu0 0.0
    %125 = vmatprep.subr.mxu0 0.0
    %126 = vmatpush2.msra.mxu0 0.0
    %127 = vmatprep.subr.mxu0 0.0
    %128 = vmatpush2.msra.mxu0 0.0
    %129 = vmatprep.subr.mxu0 0.0
    %130 = vmatpush2.msra.mxu0 0.0
    %131 = vmatprep.subr.mxu0 0.0
    %132 = vmatpush2.msra.mxu0 0.0
    %133 = vmatprep.subr.mxu0 0.0
    %134 = vmatpush2.msra.mxu0 0.0
    %135 = vmatprep.subr.mxu0 0.0
    %136 = vmatpush2.msra.mxu0 0.0
    %137 = vmatprep.subr.mxu0 0.0
    %138 = vmatpush2.msra.mxu0 0.0
    %139 = vmatprep.subr.mxu0 0.0
    %140 = vmatpush2.msra.mxu0 0.0
    %141 = vmatprep.subr.mxu0 0.0
    %142 = vmatpush2.msra.mxu0 0.0
    %143 = vmatprep.subr.mxu0 0.0
    %144 = vmatpush2.msra.mxu0 0.0
    %145 = vmatprep.subr.mxu0 0.0
    %146 = vmatpush2.msra.mxu0 0.0
    %147 = vmatprep.mubr.f32.mxu0 0.0
    %148 = vmatmul.mubr.f32.gmra.mxu0 %v81
    %v149 = vpop.f32.mrf.mxu0
    %v150 = vadd.f32 %v77, %v149
    %v151 = vpop.f32.mrf.mxu0
    %152 = vdwg.mxu0
    %v153 = vld [vmem:[#allocation5] sm:$0xff]
    %v154 = vld [vmem:[#allocation5 + $0x8] sm:$0xff]
    %v155 = vld [vmem:[#allocation5 + $0x10] sm:$0xff]
    %v156 = vld [vmem:[#allocation5 + $0x18] sm:$0xff]
    %v157 = vld [vmem:[#allocation5 + $0x20] sm:$0xff]
    %v158 = vld [vmem:[#allocation5 + $0x28] sm:$0xff]
    %v159 = vld [vmem:[#allocation5 + $0x30] sm:$0xff]
    %v160 = vld [vmem:[#allocation5 + $0x38] sm:$0xff]
    %v161 = vld [vmem:[#allocation5 + $0x40] sm:$0xff]
    %v162 = vld [vmem:[#allocation5 + $0x48] sm:$0xff]
    %v163 = vld [vmem:[#allocation5 + $0x50] sm:$0xff]
    %v164 = vld [vmem:[#allocation5 + $0x58] sm:$0xff]
    %v165 = vld [vmem:[#allocation5 + $0x60] sm:$0xff]
    %v166 = vld [vmem:[#allocation5 + $0x68] sm:$0xff]
    %v167 = vld [vmem:[#allocation5 + $0x70] sm:$0xff]
    %v168 = vld [vmem:[#allocation5 + $0x78] sm:$0xff]
    %v169 = vld [vmem:[%s4] sm:$0x1]
    %v171 = vlaneseq
    %v172 = vshrl.u32 %v171, 7
    %v173 = vsub.s32 0, %v172
    %v174 = vrot.slane %v169, %v173
    %176 = vmatprep.subr.mxu0 0.0
    %177 = vmatpush1.msra.mxu0 %v168
    %178 = vmatprep.subr.mxu0 0.0
    %179 = vmatpush1.msra.mxu0 %v167
    %180 = vmatprep.subr.mxu0 0.0
    %181 = vmatpush1.msra.mxu0 %v166
    %182 = vmatprep.subr.mxu0 0.0
    %183 = vmatpush1.msra.mxu0 %v165
    %184 = vmatprep.subr.mxu0 0.0
    %185 = vmatpush1.msra.mxu0 %v164
    %186 = vmatprep.subr.mxu0 0.0
    %187 = vmatpush1.msra.mxu0 %v163
    %188 = vmatprep.subr.mxu0 0.0
    %189 = vmatpush1.msra.mxu0 %v162
    %190 = vmatprep.subr.mxu0 0.0
    %191 = vmatpush1.msra.mxu0 %v161
    %192 = vmatprep.subr.mxu0 0.0
    %193 = vmatpush1.msra.mxu0 %v160
    %194 = vmatprep.subr.mxu0 0.0
    %195 = vmatpush1.msra.mxu0 %v159
    %196 = vmatprep.subr.mxu0 0.0
    %197 = vmatpush1.msra.mxu0 %v158
    %198 = vmatprep.subr.mxu0 0.0
    %199 = vmatpush1.msra.mxu0 %v157
    %200 = vmatprep.subr.mxu0 0.0
    %201 = vmatpush1.msra.mxu0 %v156
    %202 = vmatprep.subr.mxu0 0.0
    %203 = vmatpush1.msra.mxu0 %v155
    %204 = vmatprep.subr.mxu0 0.0
    %205 = vmatpush1.msra.mxu0 %v154
    %206 = vmatprep.subr.mxu0 0.0
    %207 = vmatpush1.msra.mxu0 %v153
    %208 = vmatprep.subr.mxu0 0.0
    %209 = vmatpush2.msra.mxu0 0.0
    %210 = vmatprep.subr.mxu0 0.0
    %211 = vmatpush2.msra.mxu0 0.0
    %212 = vmatprep.subr.mxu0 0.0
    %213 = vmatpush2.msra.mxu0 0.0
    %214 = vmatprep.subr.mxu0 0.0
    %215 = vmatpush2.msra.mxu0 0.0
    %216 = vmatprep.subr.mxu0 0.0
    %217 = vmatpush2.msra.mxu0 0.0
    %218 = vmatprep.subr.mxu0 0.0
    %219 = vmatpush2.msra.mxu0 0.0
    %220 = vmatprep.subr.mxu0 0.0
    %221 = vmatpush2.msra.mxu0 0.0
    %222 = vmatprep.subr.mxu0 0.0
    %223 = vmatpush2.msra.mxu0 0.0
    %224 = vmatprep.subr.mxu0 0.0
    %225 = vmatpush2.msra.mxu0 0.0
    %226 = vmatprep.subr.mxu0 0.0
    %227 = vmatpush2.msra.mxu0 0.0
    %228 = vmatprep.subr.mxu0 0.0
    %229 = vmatpush2.msra.mxu0 0.0
    %230 = vmatprep.subr.mxu0 0.0
    %231 = vmatpush2.msra.mxu0 0.0
    %232 = vmatprep.subr.mxu0 0.0
    %233 = vmatpush2.msra.mxu0 0.0
    %234 = vmatprep.subr.mxu0 0.0
    %235 = vmatpush2.msra.mxu0 0.0
    %236 = vmatprep.subr.mxu0 0.0
    %237 = vmatpush2.msra.mxu0 0.0
    %238 = vmatprep.subr.mxu0 0.0
    %239 = vmatpush2.msra.mxu0 0.0
    %240 = vmatprep.mubr.f32.mxu0 0.0
    %241 = vmatmul.mubr.f32.gmra.mxu0 %v150
    %v242 = vpop.f32.mrf.mxu0
    %v243 = vadd.f32 %v174, %v242
    %v244 = vpop.f32.mrf.mxu0
    %245 = vdwg.mxu0
    %246 = vmax.xlane.f32.xlu0 %v150
    %v247 = vpop.xlane.xlu0 %246
    %v248 = vsub.f32 %v150, %v247
    %v249 = vmul.f32 %v248, 1.442695
    %v250 = vpow.pop %v249
    %251 = vadd.xlane.f32.xlu0 %v250
    %v252 = vpop.xlane.xlu0 %251
    %v253 = vrcp.pop %v252
    %v254 = vmul.f32 %v250, %v253
    %v255 = vld [vmem:[#allocation7] sm:$0xff]
    %v256 = vld [vmem:[#allocation7 + $0x8] sm:$0xff]
    %v257 = vld [vmem:[#allocation7 + $0x10] sm:$0xff]
    %v258 = vld [vmem:[#allocation7 + $0x18] sm:$0xff]
    %v259 = vld [vmem:[#allocation7 + $0x20] sm:$0xff]
    %v260 = vld [vmem:[#allocation7 + $0x28] sm:$0xff]
    %v261 = vld [vmem:[#allocation7 + $0x30] sm:$0xff]
    %v262 = vld [vmem:[#allocation7 + $0x38] sm:$0xff]
    %v263 = vld [vmem:[#allocation7 + $0x40] sm:$0xff]
    %v264 = vld [vmem:[#allocation7 + $0x48] sm:$0xff]
    %v265 = vld [vmem:[#allocation7 + $0x50] sm:$0xff]
    %v266 = vld [vmem:[#allocation7 + $0x58] sm:$0xff]
    %v267 = vld [vmem:[#allocation7 + $0x60] sm:$0xff]
    %v268 = vld [vmem:[#allocation7 + $0x68] sm:$0xff]
    %v269 = vld [vmem:[#allocation7 + $0x70] sm:$0xff]
    %v270 = vld [vmem:[#allocation7 + $0x78] sm:$0xff]
    %271 = vmatprep.subr.mxu0 0.0
    %272 = vmatpush1.msra.mxu0 %v270
    %273 = vmatprep.subr.mxu0 0.0
    %274 = vmatpush1.msra.mxu0 %v269
    %275 = vmatprep.subr.mxu0 0.0
    %276 = vmatpush1.msra.mxu0 %v268
    %277 = vmatprep.subr.mxu0 0.0
    %278 = vmatpush1.msra.mxu0 %v267
    %279 = vmatprep.subr.mxu0 0.0
    %280 = vmatpush1.msra.mxu0 %v266
    %281 = vmatprep.subr.mxu0 0.0
    %282 = vmatpush1.msra.mxu0 %v265
    %283 = vmatprep.subr.mxu0 0.0
    %284 = vmatpush1.msra.mxu0 %v264
    %285 = vmatprep.subr.mxu0 0.0
    %286 = vmatpush1.msra.mxu0 %v263
    %287 = vmatprep.subr.mxu0 0.0
    %288 = vmatpush1.msra.mxu0 %v262
    %289 = vmatprep.subr.mxu0 0.0
    %290 = vmatpush1.msra.mxu0 %v261
    %291 = vmatprep.subr.mxu0 0.0
    %292 = vmatpush1.msra.mxu0 %v260
    %293 = vmatprep.subr.mxu0 0.0
    %294 = vmatpush1.msra.mxu0 %v259
    %295 = vmatprep.subr.mxu0 0.0
    %296 = vmatpush1.msra.mxu0 %v258
    %297 = vmatprep.subr.mxu0 0.0
    %298 = vmatpush1.msra.mxu0 %v257
    %299 = vmatprep.subr.mxu0 0.0
    %300 = vmatpush1.msra.mxu0 %v256
    %301 = vmatprep.subr.mxu0 0.0
    %302 = vmatpush1.msra.mxu0 %v255
    %303 = vmatprep.subr.mxu0 0.0
    %304 = vmatpush2.msra.mxu0 0.0
    %305 = vmatprep.subr.mxu0 0.0
    %306 = vmatpush2.msra.mxu0 0.0
    %307 = vmatprep.subr.mxu0 0.0
    %308 = vmatpush2.msra.mxu0 0.0
    %309 = vmatprep.subr.mxu0 0.0
    %310 = vmatpush2.msra.mxu0 0.0
    %311 = vmatprep.subr.mxu0 0.0
    %312 = vmatpush2.msra.mxu0 0.0
    %313 = vmatprep.subr.mxu0 0.0
    %314 = vmatpush2.msra.mxu0 0.0
    %315 = vmatprep.subr.mxu0 0.0
    %316 = vmatpush2.msra.mxu0 0.0
    %317 = vmatprep.subr.mxu0 0.0
    %318 = vmatpush2.msra.mxu0 0.0
    %319 = vmatprep.subr.mxu0 0.0
    %320 = vmatpush2.msra.mxu0 0.0
    %321 = vmatprep.subr.mxu0 0.0
    %322 = vmatpush2.msra.mxu0 0.0
    %323 = vmatprep.subr.mxu0 0.0
    %324 = vmatpush2.msra.mxu0 0.0
    %325 = vmatprep.subr.mxu0 0.0
    %326 = vmatpush2.msra.mxu0 0.0
    %327 = vmatprep.subr.mxu0 0.0
    %328 = vmatpush2.msra.mxu0 0.0
    %329 = vmatprep.subr.mxu0 0.0
    %330 = vmatpush2.msra.mxu0 0.0
    %331 = vmatprep.subr.mxu0 0.0
    %332 = vmatpush2.msra.mxu0 0.0
    %333 = vmatprep.subr.mxu0 0.0
    %334 = vmatpush2.msra.mxu0 0.0
    %335 = vmatprep.mubr.f32.mxu0 0.0
    %336 = vmatmul.mubr.f32.gmra.mxu0 %v254
    %v337 = vpop.f32.mrf.mxu0
    %v338 = vadd.f32 0.0, %v337
    %v339 = vpop.f32.mrf.mxu0
    %340 = vdwg.mxu0
    %341 = vst [vmem:[#allocation8] sm:$0xff] %v338
    %v342 = vadd.f32 %v254, %v243
    %343 = vst [vmem:[%s7] sm:$0xff] %v342
    // Predicated region
    $region38: #{single_forward.1} parent=1 // pred_check
      _
    $region39: #{single_forward.1} parent=1 // pred_check_branch
      %345 = sbr.rel (0) target = $region41
    $region40: #{single_forward.1} parent=1 // pred_region
      %s347 = ssub.s32 128, 128
      %348 = vsyncadd [#allocation4], %s347
      %s350 = sshll.u32 [#allocation8], 4
      %s351 = int_to_ptr.vmem [resolvable:$true] %s350
      %353 = dma.vmem_to_hbm [thread:$0]  %s351, 128, %s6, [#allocation4]
    $region41: #{single_forward.1} parent=1 // pred_fallthru
      _
    // Predicated region
    $region42: #{single_forward.1} parent=1 // pred_check
      _
    $region43: #{single_forward.1} parent=1 // pred_check_branch
      %355 = sbr.rel (0) target = $region45
    $region44: #{single_forward.1} parent=1 // pred_region
      _
    $region45: #{single_forward.1} parent=1 // pred_fallthru
      _
    // Predicated region
    $region46: #{single_forward.1} parent=1 // pred_check
      _
    $region47: #{single_forward.1} parent=1 // pred_check_branch
      %357 = sbr.rel (0) target = $region49
    $region48: #{single_forward.1} parent=1 // pred_region
      %358 = dma.done [#allocation4], 128
    $region49: #{single_forward.1} parent=1 // pred_fallthru
      _
    // Predicated region
    $region50: #{single_forward.1} parent=1 // pred_check
      _
    $region51: #{single_forward.1} parent=1 // pred_check_branch
      %360 = sbr.rel (0) target = $region53
    $region52: #{single_forward.1} parent=1 // pred_region
      _
    $region53: #{single_forward.1} parent=1 // pred_fallthru
      _
    %361 = vsyncpa [#allocation3], 1
    %362 = vsyncpa [#allocation6], 1
    %363 = vsyncpa [#allocation4], 1

</llo_original>
